<compile_context>
chip_gen: v7x
topology: tpu7x:2x2x1
jax: 0.10.0
libtpu: 0.0.40
codegen_flags: <defaults>
</compile_context>

<pallas_src>
import functools
import math

import jax
import jax.numpy as jnp
from jax import lax
from jax.experimental import pallas as pl
from jax.experimental.pallas import tpu as pltpu


def _cdiv(a, b):
    return -(-a // b)


def _pick_tiling(OH, OCH, wq_min, *, target_lanes=2048, max_out_tile_bytes=8 << 20):
    """Choose (wp, tile_oh): padded flattened row stride and output rows per grid
    step, such that tile_m = tile_oh * wp is a multiple of 128 (unmasked stores)."""
    wp, g = None, None
    for cand in range(wq_min, wq_min + 129):     # a multiple of 128 always exists in range
        gg = 128 // math.gcd(cand, 128)          # minimal rows for 128-lane alignment
        if gg <= max(OH, 1):
            wp, g = cand, gg
            break
    rows_for_target = _cdiv(target_lanes, wp)
    tile_oh = max(g, _cdiv(rows_for_target, g) * g)
    rows_vmem_cap = max(g, (max_out_tile_bytes // (2 * 4 * OCH * wp)) // g * g)
    tile_oh = min(tile_oh, rows_vmem_cap)
    tile_oh = min(tile_oh, _cdiv(OH, g) * g)     # never exceed the (rounded-up) image height
    return wp, tile_oh


def _make_kernel(KH, KW, S, C, OCH, tile_oh, wp, load_size, single_tile, use_bn):
    tile_m = tile_oh * wp
    taps = [(kh, kw) for kh in range(KH) for kw in range(KW)]
    phases = sorted({(kh % S) * S + (kw % S) for kh, kw in taps})

    def compute(x_ref, w_ref, scale_ref, shift_ref, o_ref):
        # x_ref : (1, S*S, C, L) bf16  whole phase-decomposed flattened image n (resident)
        # w_ref : (KH*KW, OCH, C) bf16 per-tap weight matrices
        # scale_ref / shift_ref : (OCH, 1) f32
        # o_ref : (1, OCH, tile_m) f32 channel-major, spatial flattened on lanes
        if single_tile:
            base = 0                                        # fully static slices
        else:
            base = pl.multiple_of(pl.program_id(1) * tile_m, 128)
        # One aligned load per phase plane; tap windows are static lane slices of it.
        slab = {p: x_ref[0, p, :, pl.ds(base, load_size)] for p in phases}
        acc = jnp.zeros((OCH, tile_m), jnp.float32)
        for kh, kw in taps:
            p = (kh % S) * S + (kw % S)
            shift = (kh // S) * wp + (kw // S)
            xs = slab[p][:, shift:shift + tile_m]           # (C, tile_m) bf16, in-register
            acc = acc + jnp.dot(w_ref[kh * KW + kw], xs,    # (OCH, C) @ (C, tile_m) on the MXU
                                preferred_element_type=jnp.float32)
        if use_bn:
            y = acc * scale_ref[...] + shift_ref[...]
        else:
            y = acc + shift_ref[...]                        # bias only (no-BN specialization)
        # ELU (alpha=1).  exp()-1 kept instead of expm1 for guaranteed Mosaic lowering.
        out = jnp.where(y > 0.0, y, jnp.exp(jnp.minimum(y, 0.0)) - 1.0)
        o_ref[...] = out[None, :, :].astype(o_ref.dtype)

    if use_bn:
        def body_bn(x_ref, w_ref, scale_ref, shift_ref, o_ref):
            compute(x_ref, w_ref, scale_ref, shift_ref, o_ref)
        return body_bn

    def body_nobn(x_ref, w_ref, shift_ref, o_ref):
        compute(x_ref, w_ref, None, shift_ref, o_ref)
    return body_nobn


def conv_block_forward(x, weight, bias, stride, *, bn_scale=None, bn_shift=None):
    """Fused Conv2d(padding=(k-1)//2) [+ folded inference BN] + ELU.

    x: (N, C, H, W) f32, weight: (OCH, ICH, KH, KW), bias: (OCH,).
    Returns (N, OCH, OH, OW) f32.  Activations go through bf16 on the MXU.
    """
    N, C, H, W = x.shape
    OCH, ICH, KH, KW = weight.shape
    assert C == ICH
    S = int(stride)
    pad = (KH - 1) // 2                               # np.floor((k-1)/2)
    OH = (H + 2 * pad - KH) // S + 1
    OW = (W + 2 * pad - KW) // S + 1

    qh_max = (KH - 1) // S
    qw_max = (KW - 1) // S
    wq_min = OW + qw_max
    wp, tile_oh = _pick_tiling(OH, OCH, wq_min)
    num_t = _cdiv(OH, tile_oh)
    OHp = num_t * tile_oh
    tile_m = tile_oh * wp

    span = qh_max * wp + qw_max                       # max tap shift in the flat frame
    span_pad = _cdiv(span, 128) * 128
    load_size = tile_m + span_pad                     # per-phase slab load, multiple of 128
    Hq = OHp + qh_max                                 # rows kept per phase plane
    L = OHp * wp + span_pad                           # flattened plane length (>= Hq*wp, %128==0)

    # ---- host glue: crop/pad -> (phase decompose) -> flatten -> bf16 (all O(input)) ----
    rows_tot, cols_tot = S * Hq, S * wp
    xc = x[:, :, :min(H, rows_tot - pad), :min(W, cols_tot - pad)]  # cropped rows/cols are never read
    x_p = jnp.pad(xc, ((0, 0), (0, 0),
                       (pad, rows_tot - pad - xc.shape[2]),
                       (pad, cols_tot - pad - xc.shape[3]))).astype(jnp.bfloat16)
    if S == 1:
        xq = x_p.reshape(N, 1, C, Hq * wp)            # stride-1 special case: pure reshape
    else:
        xq = x_p.reshape(N, C, Hq, S, wp, S)
        xq = xq.transpose(0, 3, 5, 1, 2, 4).reshape(N, S * S, C, Hq * wp)
    xq = jnp.pad(xq, ((0, 0), (0, 0), (0, 0), (0, L - Hq * wp)))

    # per-tap weight matrices (OCH, C): bf16 LHS for the transposed (lane-dense) dot
    w2 = jnp.transpose(weight, (2, 3, 0, 1)).reshape(KH * KW, OCH, C).astype(jnp.bfloat16)

    use_bn = bn_scale is not None
    if use_bn:
        scale = bn_scale.reshape(OCH, 1).astype(jnp.float32)
        shift = (bias * bn_scale + bn_shift).reshape(OCH, 1).astype(jnp.float32)
    else:
        scale = None
        shift = bias.reshape(OCH, 1).astype(jnp.float32)

    kernel = _make_kernel(KH, KW, S, C, OCH, tile_oh, wp, load_size, num_t == 1, use_bn)

    in_specs = [
        pl.BlockSpec((1, S * S, C, L), lambda n, t: (n, 0, 0, 0)),   # whole image n, reused across t
        pl.BlockSpec((KH * KW, OCH, C), lambda n, t: (0, 0, 0)),     # weights, resident
    ]
    inputs = [xq, w2]
    if use_bn:
        in_specs.append(pl.BlockSpec((OCH, 1), lambda n, t: (0, 0)))
        inputs.append(scale)
    in_specs.append(pl.BlockSpec((OCH, 1), lambda n, t: (0, 0)))
    inputs.append(shift)

    # VMEM budget from actual block bytes (x2 pipeline buffers), clamped per generation.
    need = 2 * (S * S * C * L * 2 + KH * KW * OCH * C * 2
                + OCH * tile_m * 4 + 2 * OCH * 128 * 4) + (4 << 20)
    try:
        phys_vmem = int(pltpu.get_tpu_info().vmem_capacity_bytes)
    except Exception:
        phys_vmem = 128 << 20
    vmem_limit = int(min(max(need, 32 << 20), max(need, (phys_vmem * 3) // 4)))

    out = pl.pallas_call(
        kernel,
        out_shape=jax.ShapeDtypeStruct((N, OCH, OHp * wp), jnp.float32),
        grid_spec=pltpu.PrefetchScalarGridSpec(
            num_scalar_prefetch=0,
            grid=(N, num_t),
            in_specs=in_specs,
            out_specs=pl.BlockSpec((1, OCH, tile_m), lambda n, t: (n, 0, t)),
        ),
        compiler_params=pltpu.CompilerParams(
            dimension_semantics=("parallel", "arbitrary"),
            vmem_limit_bytes=vmem_limit,
        ),
    )(*inputs)

    # Output is already channel-major: reshape + slice to NCHW (no transpose, no gather).
    return out.reshape(N, OCH, OHp, wp)[:, :, :OH, :OW]


if __name__ == "__main__":
    # Module config: Conv(ich=4, och=8, kernel_size=3, stride=1, batch_norm=False, F.elu)
    N, ICH, H, W = 2, 4, 16, 16
    OCH, KS = 8, 3

    key = jax.random.PRNGKey(0)
    kx, kw, kb, kg, kbt, km, kv = jax.random.split(key, 7)
    x = jax.random.normal(kx, (N, ICH, H, W), jnp.float32)
    weight = jax.random.normal(kw, (OCH, ICH, KS, KS), jnp.float32) * 0.1
    bias = jax.random.normal(kb, (OCH,), jnp.float32) * 0.1

    pad = (KS - 1) // 2

    def ref_conv(xi, stride):
        c = lax.conv_general_dilated(
            xi, weight, (stride, stride), [(pad, pad), (pad, pad)],
            dimension_numbers=("NCHW", "OIHW", "NCHW"))
        return c + bias.reshape(1, OCH, 1, 1)

    conv_s1 = jax.jit(functools.partial(conv_block_forward, stride=1))
    conv_s2 = jax.jit(functools.partial(conv_block_forward, stride=2))

    # --- stride 1, no BN (the stated module config) ---
    y = jax.block_until_ready(conv_s1(x, weight, bias))
    ref = jax.nn.elu(ref_conv(x, 1))
    assert y.shape == ref.shape
    if not jnp.allclose(y, ref, atol=2e-2, rtol=2e-2):      # bf16 activations on the MXU
        raise AssertionError("Pallas conv block mismatch (stride=1), max err %e"
                             % float(jnp.max(jnp.abs(y - ref))))

    # --- stride 2, no BN (exercise the phase-decomposition path) ---
    y2 = jax.block_until_ready(conv_s2(x, weight, bias))
    ref2 = jax.nn.elu(ref_conv(x, 2))
    assert y2.shape == ref2.shape
    if not jnp.allclose(y2, ref2, atol=2e-2, rtol=2e-2):
        raise AssertionError("Pallas conv block mismatch (stride=2), max err %e"
                             % float(jnp.max(jnp.abs(y2 - ref2))))

    # --- stride 1 with folded inference BatchNorm ---
    gamma = 1.0 + 0.1 * jax.random.normal(kg, (OCH,), jnp.float32)
    beta = 0.1 * jax.random.normal(kbt, (OCH,), jnp.float32)
    rmean = 0.1 * jax.random.normal(km, (OCH,), jnp.float32)
    rvar = 0.5 + jnp.abs(jax.random.normal(kv, (OCH,), jnp.float32))
    eps = 1e-5
    bn_scale = gamma / jnp.sqrt(rvar + eps)
    bn_shift = beta - rmean * bn_scale
    yb = jax.block_until_ready(conv_s1(x, weight, bias, bn_scale=bn_scale, bn_shift=bn_shift))
    cb = ref_conv(x, 1)
    refb = jax.nn.elu((cb - rmean.reshape(1, OCH, 1, 1))
                      / jnp.sqrt(rvar.reshape(1, OCH, 1, 1) + eps)
                      * gamma.reshape(1, OCH, 1, 1) + beta.reshape(1, OCH, 1, 1))
    if not jnp.allclose(yb, refb, atol=3e-2, rtol=3e-2):
        raise AssertionError("Pallas conv block mismatch (stride=1, BN)")

    print("KERNEL_OK")
</pallas_src>

<mosaic_0001>
module attributes {stable_mosaic.version = 11 : i64} {
  func.func @body_nobn(%arg0: i32, %arg1: i32, %arg2: memref<1x1x4x512xbf16, #tpu.memory_space<vmem>>, %arg3: memref<9x8x4xbf16, #tpu.memory_space<vmem>>, %arg4: memref<8x1xf32, #tpu.memory_space<vmem>>, %arg5: memref<1x8x384xf32, #tpu.memory_space<vmem>>) attributes {dimension_semantics = [#tpu.dimension_semantics<parallel>, #tpu.dimension_semantics<arbitrary>], iteration_bounds = array<i64: 2, 1>, scalar_prefetch = 0 : i64, scratch_operands = 0 : i64, tpu.core_type = #tpu.core_type<tc>, window_params = [{transform_indices = @transform_0, window_bounds = array<i64: 1, 1, 4, 512>}, {pipeline_mode = #tpu.pipeline_mode<synchronous>, transform_indices = @transform_1, window_bounds = array<i64: 9, 8, 4>}, {pipeline_mode = #tpu.pipeline_mode<synchronous>, transform_indices = @transform_2, window_bounds = array<i64: 8, 1>}, {transform_indices = @transform_3, window_bounds = array<i64: 1, 8, 384>}]} {
    %c0 = arith.constant 0 : index
    %c0_0 = arith.constant 0 : index
    %c0_1 = arith.constant 0 : index
    %c0_2 = arith.constant 0 : index
    %0 = vector.load %arg2[%c0, %c0_0, %c0_1, %c0_2] : memref<1x1x4x512xbf16, #tpu.memory_space<vmem>>, vector<1x1x4x512xbf16>
    %1 = vector.shape_cast %0 : vector<1x1x4x512xbf16> to vector<4x512xbf16>
    %cst = arith.constant 0.000000e+00 : f32
    %2 = vector.broadcast %cst : f32 to vector<8x384xf32>
    %3 = vector.extract_strided_slice %1 {offsets = [0, 0], sizes = [4, 384], strides = [1, 1]} : vector<4x512xbf16> to vector<4x384xbf16>
    %c0_3 = arith.constant 0 : index
    %c0_4 = arith.constant 0 : index
    %c0_5 = arith.constant 0 : index
    %4 = vector.load %arg3[%c0_3, %c0_4, %c0_5] : memref<9x8x4xbf16, #tpu.memory_space<vmem>>, vector<1x8x4xbf16>
    %5 = vector.shape_cast %4 : vector<1x8x4xbf16> to vector<8x4xbf16>
    %cst_6 = arith.constant dense<0.000000e+00> : vector<8x384xf32>
    %6 = tpu.matmul %5, %3, %cst_6 {dimension_numbers = #tpu.dot_dimension_numbers<[1], [0], [0], [1], [0, 0, 1, 1], [], []>} : vector<8x4xbf16>, vector<4x384xbf16>, vector<8x384xf32> -> vector<8x384xf32>
    %7 = arith.addf %2, %6 : vector<8x384xf32>
    %8 = vector.extract_strided_slice %1 {offsets = [0, 1], sizes = [4, 384], strides = [1, 1]} : vector<4x512xbf16> to vector<4x384xbf16>
    %c1 = arith.constant 1 : index
    %c0_7 = arith.constant 0 : index
    %c0_8 = arith.constant 0 : index
    %9 = vector.load %arg3[%c1, %c0_7, %c0_8] : memref<9x8x4xbf16, #tpu.memory_space<vmem>>, vector<1x8x4xbf16>
    %10 = vector.shape_cast %9 : vector<1x8x4xbf16> to vector<8x4xbf16>
    %cst_9 = arith.constant dense<0.000000e+00> : vector<8x384xf32>
    %11 = tpu.matmul %10, %8, %cst_9 {dimension_numbers = #tpu.dot_dimension_numbers<[1], [0], [0], [1], [0, 0, 1, 1], [], []>} : vector<8x4xbf16>, vector<4x384xbf16>, vector<8x384xf32> -> vector<8x384xf32>
    %12 = arith.addf %7, %11 : vector<8x384xf32>
    %13 = vector.extract_strided_slice %1 {offsets = [0, 2], sizes = [4, 384], strides = [1, 1]} : vector<4x512xbf16> to vector<4x384xbf16>
    %c2 = arith.constant 2 : index
    %c0_10 = arith.constant 0 : index
    %c0_11 = arith.constant 0 : index
    %14 = vector.load %arg3[%c2, %c0_10, %c0_11] : memref<9x8x4xbf16, #tpu.memory_space<vmem>>, vector<1x8x4xbf16>
    %15 = vector.shape_cast %14 : vector<1x8x4xbf16> to vector<8x4xbf16>
    %cst_12 = arith.constant dense<0.000000e+00> : vector<8x384xf32>
    %16 = tpu.matmul %15, %13, %cst_12 {dimension_numbers = #tpu.dot_dimension_numbers<[1], [0], [0], [1], [0, 0, 1, 1], [], []>} : vector<8x4xbf16>, vector<4x384xbf16>, vector<8x384xf32> -> vector<8x384xf32>
    %17 = arith.addf %12, %16 : vector<8x384xf32>
    %18 = vector.extract_strided_slice %1 {offsets = [0, 24], sizes = [4, 384], strides = [1, 1]} : vector<4x512xbf16> to vector<4x384xbf16>
    %c3 = arith.constant 3 : index
    %c0_13 = arith.constant 0 : index
    %c0_14 = arith.constant 0 : index
    %19 = vector.load %arg3[%c3, %c0_13, %c0_14] : memref<9x8x4xbf16, #tpu.memory_space<vmem>>, vector<1x8x4xbf16>
    %20 = vector.shape_cast %19 : vector<1x8x4xbf16> to vector<8x4xbf16>
    %cst_15 = arith.constant dense<0.000000e+00> : vector<8x384xf32>
    %21 = tpu.matmul %20, %18, %cst_15 {dimension_numbers = #tpu.dot_dimension_numbers<[1], [0], [0], [1], [0, 0, 1, 1], [], []>} : vector<8x4xbf16>, vector<4x384xbf16>, vector<8x384xf32> -> vector<8x384xf32>
    %22 = arith.addf %17, %21 : vector<8x384xf32>
    %23 = vector.extract_strided_slice %1 {offsets = [0, 25], sizes = [4, 384], strides = [1, 1]} : vector<4x512xbf16> to vector<4x384xbf16>
    %c4 = arith.constant 4 : index
    %c0_16 = arith.constant 0 : index
    %c0_17 = arith.constant 0 : index
    %24 = vector.load %arg3[%c4, %c0_16, %c0_17] : memref<9x8x4xbf16, #tpu.memory_space<vmem>>, vector<1x8x4xbf16>
    %25 = vector.shape_cast %24 : vector<1x8x4xbf16> to vector<8x4xbf16>
    %cst_18 = arith.constant dense<0.000000e+00> : vector<8x384xf32>
    %26 = tpu.matmul %25, %23, %cst_18 {dimension_numbers = #tpu.dot_dimension_numbers<[1], [0], [0], [1], [0, 0, 1, 1], [], []>} : vector<8x4xbf16>, vector<4x384xbf16>, vector<8x384xf32> -> vector<8x384xf32>
    %27 = arith.addf %22, %26 : vector<8x384xf32>
    %28 = vector.extract_strided_slice %1 {offsets = [0, 26], sizes = [4, 384], strides = [1, 1]} : vector<4x512xbf16> to vector<4x384xbf16>
    %c5 = arith.constant 5 : index
    %c0_19 = arith.constant 0 : index
    %c0_20 = arith.constant 0 : index
    %29 = vector.load %arg3[%c5, %c0_19, %c0_20] : memref<9x8x4xbf16, #tpu.memory_space<vmem>>, vector<1x8x4xbf16>
    %30 = vector.shape_cast %29 : vector<1x8x4xbf16> to vector<8x4xbf16>
    %cst_21 = arith.constant dense<0.000000e+00> : vector<8x384xf32>
    %31 = tpu.matmul %30, %28, %cst_21 {dimension_numbers = #tpu.dot_dimension_numbers<[1], [0], [0], [1], [0, 0, 1, 1], [], []>} : vector<8x4xbf16>, vector<4x384xbf16>, vector<8x384xf32> -> vector<8x384xf32>
    %32 = arith.addf %27, %31 : vector<8x384xf32>
    %33 = vector.extract_strided_slice %1 {offsets = [0, 48], sizes = [4, 384], strides = [1, 1]} : vector<4x512xbf16> to vector<4x384xbf16>
    %c6 = arith.constant 6 : index
    %c0_22 = arith.constant 0 : index
    %c0_23 = arith.constant 0 : index
    %34 = vector.load %arg3[%c6, %c0_22, %c0_23] : memref<9x8x4xbf16, #tpu.memory_space<vmem>>, vector<1x8x4xbf16>
    %35 = vector.shape_cast %34 : vector<1x8x4xbf16> to vector<8x4xbf16>
    %cst_24 = arith.constant dense<0.000000e+00> : vector<8x384xf32>
    %36 = tpu.matmul %35, %33, %cst_24 {dimension_numbers = #tpu.dot_dimension_numbers<[1], [0], [0], [1], [0, 0, 1, 1], [], []>} : vector<8x4xbf16>, vector<4x384xbf16>, vector<8x384xf32> -> vector<8x384xf32>
    %37 = arith.addf %32, %36 : vector<8x384xf32>
    %38 = vector.extract_strided_slice %1 {offsets = [0, 49], sizes = [4, 384], strides = [1, 1]} : vector<4x512xbf16> to vector<4x384xbf16>
    %c7 = arith.constant 7 : index
    %c0_25 = arith.constant 0 : index
    %c0_26 = arith.constant 0 : index
    %39 = vector.load %arg3[%c7, %c0_25, %c0_26] : memref<9x8x4xbf16, #tpu.memory_space<vmem>>, vector<1x8x4xbf16>
    %40 = vector.shape_cast %39 : vector<1x8x4xbf16> to vector<8x4xbf16>
    %cst_27 = arith.constant dense<0.000000e+00> : vector<8x384xf32>
    %41 = tpu.matmul %40, %38, %cst_27 {dimension_numbers = #tpu.dot_dimension_numbers<[1], [0], [0], [1], [0, 0, 1, 1], [], []>} : vector<8x4xbf16>, vector<4x384xbf16>, vector<8x384xf32> -> vector<8x384xf32>
    %42 = arith.addf %37, %41 : vector<8x384xf32>
    %43 = vector.extract_strided_slice %1 {offsets = [0, 50], sizes = [4, 384], strides = [1, 1]} : vector<4x512xbf16> to vector<4x384xbf16>
    %c8 = arith.constant 8 : index
    %c0_28 = arith.constant 0 : index
    %c0_29 = arith.constant 0 : index
    %44 = vector.load %arg3[%c8, %c0_28, %c0_29] : memref<9x8x4xbf16, #tpu.memory_space<vmem>>, vector<1x8x4xbf16>
    %45 = vector.shape_cast %44 : vector<1x8x4xbf16> to vector<8x4xbf16>
    %cst_30 = arith.constant dense<0.000000e+00> : vector<8x384xf32>
    %46 = tpu.matmul %45, %43, %cst_30 {dimension_numbers = #tpu.dot_dimension_numbers<[1], [0], [0], [1], [0, 0, 1, 1], [], []>} : vector<8x4xbf16>, vector<4x384xbf16>, vector<8x384xf32> -> vector<8x384xf32>
    %47 = arith.addf %42, %46 : vector<8x384xf32>
    %c0_31 = arith.constant 0 : index
    %c0_32 = arith.constant 0 : index
    %48 = vector.load %arg4[%c0_31, %c0_32] : memref<8x1xf32, #tpu.memory_space<vmem>>, vector<8x1xf32>
    %49 = vector.broadcast %48 : vector<8x1xf32> to vector<8x384xf32>
    %50 = arith.addf %47, %49 : vector<8x384xf32>
    %cst_33 = arith.constant 0.000000e+00 : f32
    %51 = vector.broadcast %cst_33 : f32 to vector<8x384xf32>
    %52 = arith.cmpf ogt, %50, %51 : vector<8x384xf32>
    %cst_34 = arith.constant 0.000000e+00 : f32
    %53 = vector.broadcast %cst_34 : f32 to vector<8x384xf32>
    %54 = arith.minimumf %50, %53 : vector<8x384xf32>
    %55 = math.exp %54 : vector<8x384xf32>
    %cst_35 = arith.constant 1.000000e+00 : f32
    %56 = vector.broadcast %cst_35 : f32 to vector<8x384xf32>
    %57 = arith.subf %55, %56 : vector<8x384xf32>
    %58 = arith.select %52, %50, %57 : vector<8x384xi1>, vector<8x384xf32>
    %59 = vector.shape_cast %58 : vector<8x384xf32> to vector<1x8x384xf32>
    %c0_36 = arith.constant 0 : index
    %c0_37 = arith.constant 0 : index
    %c0_38 = arith.constant 0 : index
    %60 = vector.load %arg5[%c0_36, %c0_37, %c0_38] : memref<1x8x384xf32, #tpu.memory_space<vmem>>, vector<1x8x384xf32>
    tpu.vector_store %arg5[%c0_36, %c0_37, %c0_38], %59 {strides = array<i32>} : memref<1x8x384xf32, #tpu.memory_space<vmem>>, vector<1x8x384xf32>,
    return
  }
  func.func @transform_0(%arg0: i32, %arg1: i32) -> (i32, i32, i32, i32) {
    %c0_i32 = arith.constant 0 : i32
    %c0_i32_0 = arith.constant 0 : i32
    %c0_i32_1 = arith.constant 0 : i32
    %c0_i32_2 = arith.constant 0 : i32
    return %arg0, %c0_i32, %c0_i32_0, %c0_i32_1 : i32, i32, i32, i32
  }
  func.func @transform_1(%arg0: i32, %arg1: i32) -> (i32, i32, i32) {
    %c0_i32 = arith.constant 0 : i32
    %c0_i32_0 = arith.constant 0 : i32
    %c0_i32_1 = arith.constant 0 : i32
    %c0_i32_2 = arith.constant 0 : i32
    return %c0_i32, %c0_i32_0, %c0_i32_1 : i32, i32, i32
  }
  func.func @transform_2(%arg0: i32, %arg1: i32) -> (i32, i32) {
    %c0_i32 = arith.constant 0 : i32
    %c0_i32_0 = arith.constant 0 : i32
    %c0_i32_1 = arith.constant 0 : i32
    return %c0_i32, %c0_i32_0 : i32, i32
  }
  func.func @transform_3(%arg0: i32, %arg1: i32) -> (i32, i32, i32) {
    %c0_i32 = arith.constant 0 : i32
    %c0_i32_0 = arith.constant 0 : i32
    return %arg0, %c0_i32, %arg1 : i32, i32, i32
  }
}

</mosaic_0001>

<llo_original>
// kernel: conv_block_forward.1
$region0: #{conv_block_forward.1}
  #allocation0 [shape = 'u32[]', space=smem, size = 0x4, offset = 0x4, fixed_abs, tag = 'smem constant byte address 0x4 - core index']
  #allocation1 [shape = 'u32[144,128]{1,0:T(1,128)}', space=vmem, size = 0x12000, scoped, tag = 'internal scratch']
  %s0 = inlined_call_operand.vmem [shape: bf16[2,1,4,512], index: 0, kind: input, shape index: {}]
  %s1 = inlined_call_operand.vmem [shape: bf16[9,8,4], index: 1, kind: input, shape index: {}]
  %s2 = inlined_call_operand.vmem [shape: f32[8,1], index: 2, kind: input, shape index: {}]
  %s3 = inlined_call_operand.vmem [shape: f32[2,8,384], index: 3, kind: output, shape index: {}]
  %s4 = sld [smem:[#allocation0]]
  $region45: #{conv_block_forward.1} parent=0
    _
  %s6 = ssub.s32 1, %s4
  %s7 = scalar_select 0, %s6, %s4
  loop: start=0, step=1, limit=4
  $region2: #{conv_block_forward.1} parent=0 // loop_pre_header
    _
  $region3: #{conv_block_forward.1} parent=0 // loop_header
    %s9 = sphi 0, %s13
    %p10 = scmp.ge.s32.totalorder %s9, 4
    %s16 = sphi 0, %s28
    %s17 = sphi 0, %s24
    %s18 = sphi 0, %s16
    %s19 = sphi 0, %s17
    %s20 = sphi 0, %s18
    %s21 = sphi 0, %s19
    %s31 = sphi 0, %s33
    %s34 = sphi 0, %s31
    %s35 = sphi 0, %s34
    %s51 = sphi 0, %s35
    %s55 = sphi 0, %s55
    %s57 = sphi 0, %s55
    %s58 = sphi 0, %s57
    %s72 = sphi 0, %s58
    %s76 = sphi 0, %s76
    %s78 = sphi 0, %s76
    %s79 = sphi 0, %s78
    %s93 = sphi 0, %s79
    %s101 = sphi 0, %s103
    %s104 = sphi 0, %s101
    %s105 = sphi 0, %s104
    %s121 = sphi 0, %s105
  $region4: #{conv_block_forward.1} parent=0 // loop_header_branch
    %12 = sbr.rel (%p10) target = $region8
  $region5: #{conv_block_forward.1} parent=0 // loop_body
    %s14 = ssub.s32 %s9, 1
    %s15 = ssub.s32 %s9, 2
    %s22 = sadd.s32 1, %s17
    %p23 = scmp.ge.s32.totalorder %s22, 1
    %s24 = scalar_select %p23, 0, %s22
    %s25 = sadd.s32 1, %s16
    %s26 = scalar_select %p23, %s25, %s16
    %p27 = scmp.ge.s32.totalorder %s26, 2
    %s28 = scalar_select %p27, 0, %s26
    %s29 = ssub.s32 %s16, %s28
    %p30 = scmp.eq.s32.totalorder %s29, 0
    %s32 = sadd.s32 %s31, 1
    %s33 = scalar_select %p30, %s31, %s32
    %p36 = pneg %p30
    %p37 = scmp.eq.s32.totalorder %s9, 1
    %p38 = por %p36, %p37
    %p39 = scmp.ne.s32.totalorder %s31, %s34
    %p40 = scmp.eq.s32.totalorder %s9, 0
    %p41 = por %p39, %p40
    %p42 = scmp.ne.s32.totalorder %s31, %s34
    %p43 = scmp.eq.s32.totalorder %s14, 1
    %p44 = por %p42, %p43
    %p45 = scmp.ne.s32.totalorder %s34, %s35
    %p46 = scmp.eq.s32.totalorder %s14, 0
    %p47 = por %p45, %p46
    %p48 = scmp.ne.s32.totalorder %s34, %s35
    %p49 = scmp.eq.s32.totalorder %s15, 1
    %p50 = por %p48, %p49
    %p52 = scmp.ne.s32.totalorder %s35, %s51
    %p53 = scmp.eq.s32.totalorder %s15, 0
    %p54 = por %p52, %p53
    %s56 = sadd.s32 %s55, 1
    %p59 = scmp.eq.s32.totalorder %s9, 1
    %p60 = scmp.ne.s32.totalorder %s55, %s57
    %p61 = scmp.eq.s32.totalorder %s9, 0
    %p62 = por %p60, %p61
    %p63 = scmp.ne.s32.totalorder %s55, %s57
    %p64 = scmp.eq.s32.totalorder %s14, 1
    %p65 = por %p63, %p64
    %p66 = scmp.ne.s32.totalorder %s57, %s58
    %p67 = scmp.eq.s32.totalorder %s14, 0
    %p68 = por %p66, %p67
    %p69 = scmp.ne.s32.totalorder %s57, %s58
    %p70 = scmp.eq.s32.totalorder %s15, 1
    %p71 = por %p69, %p70
    %p73 = scmp.ne.s32.totalorder %s58, %s72
    %p74 = scmp.eq.s32.totalorder %s15, 0
    %p75 = por %p73, %p74
    %s77 = sadd.s32 %s76, 1
    %p80 = scmp.eq.s32.totalorder %s9, 1
    %p81 = scmp.ne.s32.totalorder %s76, %s78
    %p82 = scmp.eq.s32.totalorder %s9, 0
    %p83 = por %p81, %p82
    %p84 = scmp.ne.s32.totalorder %s76, %s78
    %p85 = scmp.eq.s32.totalorder %s14, 1
    %p86 = por %p84, %p85
    %p87 = scmp.ne.s32.totalorder %s78, %s79
    %p88 = scmp.eq.s32.totalorder %s14, 0
    %p89 = por %p87, %p88
    %p90 = scmp.ne.s32.totalorder %s78, %s79
    %p91 = scmp.eq.s32.totalorder %s15, 1
    %p92 = por %p90, %p91
    %p94 = scmp.ne.s32.totalorder %s79, %s93
    %p95 = scmp.eq.s32.totalorder %s15, 0
    %p96 = por %p94, %p95
    %s97 = ssub.s32 %s16, %s28
    %s98 = ssub.s32 %s17, %s24
    %s99 = sor.u32 %s97, %s98
    %p100 = scmp.eq.s32.totalorder %s99, 0
    %s102 = sadd.s32 %s101, 1
    %s103 = scalar_select %p100, %s101, %s102
    %p106 = pneg %p100
    %p107 = scmp.eq.s32.totalorder %s9, 1
    %p108 = por %p106, %p107
    %p109 = scmp.ne.s32.totalorder %s101, %s104
    %p110 = scmp.eq.s32.totalorder %s9, 0
    %p111 = por %p109, %p110
    %p112 = scmp.ne.s32.totalorder %s101, %s104
    %p113 = scmp.eq.s32.totalorder %s14, 1
    %p114 = por %p112, %p113
    %p115 = scmp.ne.s32.totalorder %s104, %s105
    %p116 = scmp.eq.s32.totalorder %s14, 0
    %p117 = por %p115, %p116
    %p118 = scmp.ne.s32.totalorder %s104, %s105
    %p119 = scmp.eq.s32.totalorder %s15, 1
    %p120 = por %p118, %p119
    %p122 = scmp.ne.s32.totalorder %s105, %s121
    %p123 = scmp.eq.s32.totalorder %s15, 0
    %p124 = por %p122, %p123
    %p125 = scmp.le.s32.totalorder 1, %s9
    %p126 = scmp.lt.s32.totalorder %s9, 3
    %p127 = pnand %p125, %p126
    %p128 = pneg %p127
    // Predicated region
    $region9: #{conv_block_forward.1} parent=5 // pred_check
      _
    $region10: #{conv_block_forward.1} parent=5 // pred_check_branch
      %130 = sbr.rel (%p127) target = $region12
    $region11: #{conv_block_forward.1} parent=5 // pred_region
      %s131 = ssub.s32 %s9, 1
      // Predicated region
      $region13: #{conv_block_forward.1} parent=11 // pred_check
        %p132 = pneg %p68
      $region14: #{conv_block_forward.1} parent=11 // pred_check_branch
        %134 = sbr.rel (%p132) target = $region16
      $region15: #{conv_block_forward.1} parent=11 // pred_region
        _
      $region16: #{conv_block_forward.1} parent=11 // pred_fallthru
        _
      // Predicated region
      $region17: #{conv_block_forward.1} parent=11 // pred_check
        %p135 = pneg %p89
      $region18: #{conv_block_forward.1} parent=11 // pred_check_branch
        %137 = sbr.rel (%p135) target = $region20
      $region19: #{conv_block_forward.1} parent=11 // pred_region
        _
      $region20: #{conv_block_forward.1} parent=11 // pred_fallthru
        _
    $region12: #{conv_block_forward.1} parent=5 // pred_fallthru
      _
    %p138 = scmp.lt.s32.totalorder %s9, 2
    // Predicated region
    $region21: #{conv_block_forward.1} parent=5 // pred_check
      %p139 = pneg %p138
    $region22: #{conv_block_forward.1} parent=5 // pred_check_branch
      %141 = sbr.rel (%p139) target = $region24
    $region23: #{conv_block_forward.1} parent=5 // pred_region
      // Predicated region
      $region25: #{conv_block_forward.1} parent=23 // pred_check
        %p142 = pneg %p41
      $region26: #{conv_block_forward.1} parent=23 // pred_check_branch
        %144 = sbr.rel (%p142) target = $region28
      $region27: #{conv_block_forward.1} parent=23 // pred_region
        %p145 = scmp.lt.s32.totalorder %s16, 1
        %s146 = scalar_select %p145, %s16, 1
        %s147 = smul.addr %s146, 4
        %s148 = smul.addr %s147, 2
        %s149 = scalar_lea.vmem %s0, %s148
      $region28: #{conv_block_forward.1} parent=23 // pred_fallthru
        _
    $region24: #{conv_block_forward.1} parent=5 // pred_fallthru
      _
    %p150 = scmp.le.s32.totalorder 1, %s9
    %p151 = scmp.lt.s32.totalorder %s9, 3
    %p152 = pnand %p150, %p151
    %p153 = pneg %p152
    // Predicated region
    $region29: #{conv_block_forward.1} parent=5 // pred_check
      _
    $region30: #{conv_block_forward.1} parent=5 // pred_check_branch
      %155 = sbr.rel (%p152) target = $region32
    $region31: #{conv_block_forward.1} parent=5 // pred_region
      %s156 = ssub.s32 %s9, 1
      %p157 = scmp.lt.s32.totalorder %s18, 1
      %s158 = scalar_select %p157, %s18, 1
      %s159 = smul.addr %s158, 4
      %s160 = smul.addr %s159, 2
      %s161 = scalar_lea.vmem %s0, %s160
      %p162 = pneg %p47
      %p163 = pneg %p44
      %p164 = pneg %p68
      %p165 = pneg %p65
      %p166 = pneg %p89
      %p167 = pneg %p86
      %p168 = pneg %p117
      %p169 = pneg %p114
      %s170 = smul.u32 3, %s19
      %p171 = scmp.lt.s32.totalorder %s18, 1
      %s172 = scalar_select %p171, %s18, 1
      %p173 = scmp.lt.s32.totalorder %s170, 2
      %s174 = scalar_select %p173, %s170, 2
      %s175 = smul.addr %s172, 3
      %s176 = sadd.s32 %s174, %s175
      %s177 = smul.addr %s176, 8
      %s178 = scalar_lea.vmem %s3, %s177
      %p179 = scmp.lt.s32.totalorder %s18, 1
      %s180 = scalar_select %p179, %s18, 1
      %s181 = smul.addr %s180, 4
      %s182 = smul.addr %s181, 2
      %s183 = scalar_lea.vmem %s0, %s182
      %s184 = smul.u32 3, %s19
      %p185 = scmp.lt.s32.totalorder %s18, 1
      %s186 = scalar_select %p185, %s18, 1
      %p187 = scmp.lt.s32.totalorder %s184, 2
      %s188 = scalar_select %p187, %s184, 2
      %s189 = smul.addr %s186, 3
      %s190 = sadd.s32 %s188, %s189
      %s191 = smul.addr %s190, 8
      %s192 = scalar_lea.vmem %s3, %s191
      %s193 = smul.u32 3, %s19
      %v195 = vld [vmem:[%s183] sm:$0xff]
      %v196 = vld [vmem:[%s1] sm:$0xf]
      %s197 = scalar_lea.vmem %s1, 4
      %v198 = vld [vmem:[%s197] sm:$0xf]
      %v200 = vcombine.high %v195, %v195
      %v202 = vunpack.c.l.s4 1983009808
      %v203 = vunpack.c.0.s8 %v202
      %v204 = vlaneseq
      %v205 = vshrl.u32 %v204, 7
      %v206 = vsub.s32 %v203, %v205
      %v207 = vrot.slane %v195, %v206
      %v209 = vunpack.c.l.s4 1983009808
      %v210 = vunpack.c.0.s8 %v209
      %v211 = vlaneseq
      %v212 = vshrl.u32 %v211, 7
      %v213 = vsub.s32 %v210, %v212
      %v214 = vrot.slane %v200, %v213
      %v215 = vcombine.high %v207, %v207
      %v216 = vcombine.high %v214, %v214
      %217 = vrot.lane.b32.xlu0 %v207, 127
      %v218 = vpop.permute.xlu0 %217
      %219 = vrot.lane.b32.xlu0 %v215, 127
      %v220 = vpop.permute.xlu0 %219
      %221 = vrot.lane.b32.xlu0 %v214, 127
      %v222 = vpop.permute.xlu0 %221
      %223 = vrot.lane.b32.xlu0 %v216, 127
      %v224 = vpop.permute.xlu0 %223
      %vm225 = vcmask 1039360
      %v226 = vsel %vm225, %v218, %v220
      %v227 = vsel %vm225, %v220, %v222
      %v228 = vsel %vm225, %v222, %v224
      %vm229 = vcmask 31744
      %v231 = vsel %vm229, %v198, 0
      %vm233 = vcmask 1041408
      %v235 = vsel %vm233, %v226, 0
      %v238 = vsel %vm233, %v227, 0
      %v241 = vsel %vm233, %v228, 0
      %243 = vmatprep.subr.bf16.mxu0 %v238
      %244 = vmatpush1.bf16.msra.mxu0 %v235
      %245 = vmatprep.subr.bf16.mxu0 0
      %246 = vmatpush1.bf16.msra.mxu0 0
      %247 = vmatprep.subr.bf16.mxu0 0
      %248 = vmatpush1.bf16.msra.mxu0 0
      %249 = vmatprep.subr.bf16.mxu0 0
      %250 = vmatpush1.bf16.msra.mxu0 0
      %251 = vmatprep.subr.bf16.mxu0 0
      %252 = vmatpush1.bf16.msra.mxu0 0
      %253 = vmatprep.subr.bf16.mxu0 0
      %254 = vmatpush1.bf16.msra.mxu0 0
      %255 = vmatprep.subr.bf16.mxu0 0
      %256 = vmatpush1.bf16.msra.mxu0 0
      %257 = vmatprep.subr.bf16.mxu0 0
      %258 = vmatpush1.bf16.msra.mxu0 0
      %259 = vmatprep.subr.bf16.mxu0 0
      %260 = vmatpush1.bf16.msra.mxu0 0
      %261 = vmatprep.subr.bf16.mxu0 0
      %262 = vmatpush1.bf16.msra.mxu0 0
      %263 = vmatprep.subr.bf16.mxu0 0
      %264 = vmatpush1.bf16.msra.mxu0 0
      %265 = vmatprep.subr.bf16.mxu0 0
      %266 = vmatpush1.bf16.msra.mxu0 0
      %267 = vmatprep.subr.bf16.mxu0 0
      %268 = vmatpush1.bf16.msra.mxu0 0
      %269 = vmatprep.subr.bf16.mxu0 0
      %270 = vmatpush1.bf16.msra.mxu0 0
      %271 = vmatprep.subr.bf16.mxu0 0
      %272 = vmatpush1.bf16.msra.mxu0 0
      %273 = vmatprep.subr.bf16.mxu0 0
      %274 = vmatpush1.bf16.msra.mxu0 0
      %275 = vmatprep.mubr.bf16.mxu0 0
      %276 = vmatmul.mubr.bf16.gmra.mrb[0].mxu0 %v231
      %v277 = vpop.f32.mrb[0].mxu0
      %v278 = vadd.f32 0.0, %v277
      %v279 = vpop.f32.mrb[0].mxu0
      %v280 = vadd.f32 0.0, %v279
      %v281 = vpop.f32.mrb[0].mxu0
      %v282 = vpop.f32.mrb[0].mxu0
      %283 = vdwg.mxu0
      %284 = vmatprep.subr.bf16.mxu0 0
      %285 = vmatpush1.bf16.msra.mxu0 %v241
      %286 = vmatprep.subr.bf16.mxu0 0
      %287 = vmatpush1.bf16.msra.mxu0 0
      %288 = vmatprep.subr.bf16.mxu0 0
      %289 = vmatpush1.bf16.msra.mxu0 0
      %290 = vmatprep.subr.bf16.mxu0 0
      %291 = vmatpush1.bf16.msra.mxu0 0
      %292 = vmatprep.subr.bf16.mxu0 0
      %293 = vmatpush1.bf16.msra.mxu0 0
      %294 = vmatprep.subr.bf16.mxu0 0
      %295 = vmatpush1.bf16.msra.mxu0 0
      %296 = vmatprep.subr.bf16.mxu0 0
      %297 = vmatpush1.bf16.msra.mxu0 0
      %298 = vmatprep.subr.bf16.mxu0 0
      %299 = vmatpush1.bf16.msra.mxu0 0
      %300 = vmatprep.subr.bf16.mxu0 0
      %301 = vmatpush1.bf16.msra.mxu0 0
      %302 = vmatprep.subr.bf16.mxu0 0
      %303 = vmatpush1.bf16.msra.mxu0 0
      %304 = vmatprep.subr.bf16.mxu0 0
      %305 = vmatpush1.bf16.msra.mxu0 0
      %306 = vmatprep.subr.bf16.mxu0 0
      %307 = vmatpush1.bf16.msra.mxu0 0
      %308 = vmatprep.subr.bf16.mxu0 0
      %309 = vmatpush1.bf16.msra.mxu0 0
      %310 = vmatprep.subr.bf16.mxu0 0
      %311 = vmatpush1.bf16.msra.mxu0 0
      %312 = vmatprep.subr.bf16.mxu0 0
      %313 = vmatpush1.bf16.msra.mxu0 0
      %314 = vmatprep.subr.bf16.mxu0 0
      %315 = vmatpush1.bf16.msra.mxu0 0
      %316 = vmatprep.mubr.bf16.mxu0 0
      %317 = vmatmul.mubr.bf16.gmra.mrb[0].mxu0 %v231
      %v318 = vpop.f32.mrb[0].mxu0
      %v319 = vadd.f32 0.0, %v318
      %v320 = vpop.f32.mrb[0].mxu0
      %v321 = vpop.f32.mrb[0].mxu0
      %v322 = vpop.f32.mrb[0].mxu0
      %323 = vdwg.mxu0
      %v325 = vsel %vm229, %v196, 0
      %v328 = vsel %vm233, %v207, 0
      %v331 = vsel %vm233, %v215, 0
      %v334 = vsel %vm233, %v214, 0
      %336 = vmatprep.subr.bf16.mxu0 %v331
      %337 = vmatpush1.bf16.msra.mxu0 %v328
      %338 = vmatprep.subr.bf16.mxu0 0
      %339 = vmatpush1.bf16.msra.mxu0 0
      %340 = vmatprep.subr.bf16.mxu0 0
      %341 = vmatpush1.bf16.msra.mxu0 0
      %342 = vmatprep.subr.bf16.mxu0 0
      %343 = vmatpush1.bf16.msra.mxu0 0
      %344 = vmatprep.subr.bf16.mxu0 0
      %345 = vmatpush1.bf16.msra.mxu0 0
      %346 = vmatprep.subr.bf16.mxu0 0
      %347 = vmatpush1.bf16.msra.mxu0 0
      %348 = vmatprep.subr.bf16.mxu0 0
      %349 = vmatpush1.bf16.msra.mxu0 0
      %350 = vmatprep.subr.bf16.mxu0 0
      %351 = vmatpush1.bf16.msra.mxu0 0
      %352 = vmatprep.subr.bf16.mxu0 0
      %353 = vmatpush1.bf16.msra.mxu0 0
      %354 = vmatprep.subr.bf16.mxu0 0
      %355 = vmatpush1.bf16.msra.mxu0 0
      %356 = vmatprep.subr.bf16.mxu0 0
      %357 = vmatpush1.bf16.msra.mxu0 0
      %358 = vmatprep.subr.bf16.mxu0 0
      %359 = vmatpush1.bf16.msra.mxu0 0
      %360 = vmatprep.subr.bf16.mxu0 0
      %361 = vmatpush1.bf16.msra.mxu0 0
      %362 = vmatprep.subr.bf16.mxu0 0
      %363 = vmatpush1.bf16.msra.mxu0 0
      %364 = vmatprep.subr.bf16.mxu0 0
      %365 = vmatpush1.bf16.msra.mxu0 0
      %366 = vmatprep.subr.bf16.mxu0 0
      %367 = vmatpush1.bf16.msra.mxu0 0
      %368 = vmatprep.mubr.bf16.mxu0 0
      %369 = vmatmul.mubr.bf16.gmra.mrb[0].mxu0 %v325
      %v370 = vpop.f32.mrb[0].mxu0
      %v371 = vadd.f32 %v278, %v370
      %v372 = vpop.f32.mrb[0].mxu0
      %v373 = vadd.f32 %v280, %v372
      %v374 = vpop.f32.mrb[0].mxu0
      %v375 = vpop.f32.mrb[0].mxu0
      %376 = vdwg.mxu0
      %377 = vmatprep.subr.bf16.mxu0 0
      %378 = vmatpush1.bf16.msra.mxu0 %v334
      %379 = vmatprep.subr.bf16.mxu0 0
      %380 = vmatpush1.bf16.msra.mxu0 0
      %381 = vmatprep.subr.bf16.mxu0 0
      %382 = vmatpush1.bf16.msra.mxu0 0
      %383 = vmatprep.subr.bf16.mxu0 0
      %384 = vmatpush1.bf16.msra.mxu0 0
      %385 = vmatprep.subr.bf16.mxu0 0
      %386 = vmatpush1.bf16.msra.mxu0 0
      %387 = vmatprep.subr.bf16.mxu0 0
      %388 = vmatpush1.bf16.msra.mxu0 0
      %389 = vmatprep.subr.bf16.mxu0 0
      %390 = vmatpush1.bf16.msra.mxu0 0
      %391 = vmatprep.subr.bf16.mxu0 0
      %392 = vmatpush1.bf16.msra.mxu0 0
      %393 = vmatprep.subr.bf16.mxu0 0
      %394 = vmatpush1.bf16.msra.mxu0 0
      %395 = vmatprep.subr.bf16.mxu0 0
      %396 = vmatpush1.bf16.msra.mxu0 0
      %397 = vmatprep.subr.bf16.mxu0 0
      %398 = vmatpush1.bf16.msra.mxu0 0
      %399 = vmatprep.subr.bf16.mxu0 0
      %400 = vmatpush1.bf16.msra.mxu0 0
      %401 = vmatprep.subr.bf16.mxu0 0
      %402 = vmatpush1.bf16.msra.mxu0 0
      %403 = vmatprep.subr.bf16.mxu0 0
      %404 = vmatpush1.bf16.msra.mxu0 0
      %405 = vmatprep.subr.bf16.mxu0 0
      %406 = vmatpush1.bf16.msra.mxu0 0
      %407 = vmatprep.subr.bf16.mxu0 0
      %408 = vmatpush1.bf16.msra.mxu0 0
      %409 = vmatprep.mubr.bf16.mxu0 0
      %410 = vmatmul.mubr.bf16.gmra.mrb[0].mxu0 %v325
      %v411 = vpop.f32.mrb[0].mxu0
      %v412 = vadd.f32 %v319, %v411
      %v413 = vpop.f32.mrb[0].mxu0
      %v414 = vpop.f32.mrb[0].mxu0
      %v415 = vpop.f32.mrb[0].mxu0
      %416 = vdwg.mxu0
      %s417 = scalar_lea.vmem %s1, 8
      %v418 = vld [vmem:[%s417] sm:$0xf]
      %419 = vrot.lane.b32.xlu0 %v207, 126
      %v420 = vpop.permute.xlu0 %419
      %421 = vrot.lane.b32.xlu0 %v215, 126
      %v422 = vpop.permute.xlu0 %421
      %423 = vrot.lane.b32.xlu0 %v214, 126
      %v424 = vpop.permute.xlu0 %423
      %425 = vrot.lane.b32.xlu0 %v216, 126
      %v426 = vpop.permute.xlu0 %425
      %vm427 = vcmask 1031168
      %v428 = vsel %vm427, %v420, %v422
      %v429 = vsel %vm427, %v422, %v424
      %v430 = vsel %vm427, %v424, %v426
      %v432 = vsel %vm229, %v418, 0
      %v435 = vsel %vm233, %v428, 0
      %v438 = vsel %vm233, %v429, 0
      %v441 = vsel %vm233, %v430, 0
      %443 = vmatprep.subr.bf16.mxu0 %v438
      %444 = vmatpush1.bf16.msra.mxu0 %v435
      %445 = vmatprep.subr.bf16.mxu0 0
      %446 = vmatpush1.bf16.msra.mxu0 0
      %447 = vmatprep.subr.bf16.mxu0 0
      %448 = vmatpush1.bf16.msra.mxu0 0
      %449 = vmatprep.subr.bf16.mxu0 0
      %450 = vmatpush1.bf16.msra.mxu0 0
      %451 = vmatprep.subr.bf16.mxu0 0
      %452 = vmatpush1.bf16.msra.mxu0 0
      %453 = vmatprep.subr.bf16.mxu0 0
      %454 = vmatpush1.bf16.msra.mxu0 0
      %455 = vmatprep.subr.bf16.mxu0 0
      %456 = vmatpush1.bf16.msra.mxu0 0
      %457 = vmatprep.subr.bf16.mxu0 0
      %458 = vmatpush1.bf16.msra.mxu0 0
      %459 = vmatprep.subr.bf16.mxu0 0
      %460 = vmatpush1.bf16.msra.mxu0 0
      %461 = vmatprep.subr.bf16.mxu0 0
      %462 = vmatpush1.bf16.msra.mxu0 0
      %463 = vmatprep.subr.bf16.mxu0 0
      %464 = vmatpush1.bf16.msra.mxu0 0
      %465 = vmatprep.subr.bf16.mxu0 0
      %466 = vmatpush1.bf16.msra.mxu0 0
      %467 = vmatprep.subr.bf16.mxu0 0
      %468 = vmatpush1.bf16.msra.mxu0 0
      %469 = vmatprep.subr.bf16.mxu0 0
      %470 = vmatpush1.bf16.msra.mxu0 0
      %471 = vmatprep.subr.bf16.mxu0 0
      %472 = vmatpush1.bf16.msra.mxu0 0
      %473 = vmatprep.subr.bf16.mxu0 0
      %474 = vmatpush1.bf16.msra.mxu0 0
      %475 = vmatprep.mubr.bf16.mxu0 0
      %476 = vmatmul.mubr.bf16.gmra.mrb[0].mxu0 %v432
      %v477 = vpop.f32.mrb[0].mxu0
      %v478 = vadd.f32 0.0, %v477
      %v479 = vpop.f32.mrb[0].mxu0
      %v480 = vadd.f32 0.0, %v479
      %v481 = vpop.f32.mrb[0].mxu0
      %v482 = vpop.f32.mrb[0].mxu0
      %483 = vdwg.mxu0
      %484 = vmatprep.subr.bf16.mxu0 0
      %485 = vmatpush1.bf16.msra.mxu0 %v441
      %486 = vmatprep.subr.bf16.mxu0 0
      %487 = vmatpush1.bf16.msra.mxu0 0
      %488 = vmatprep.subr.bf16.mxu0 0
      %489 = vmatpush1.bf16.msra.mxu0 0
      %490 = vmatprep.subr.bf16.mxu0 0
      %491 = vmatpush1.bf16.msra.mxu0 0
      %492 = vmatprep.subr.bf16.mxu0 0
      %493 = vmatpush1.bf16.msra.mxu0 0
      %494 = vmatprep.subr.bf16.mxu0 0
      %495 = vmatpush1.bf16.msra.mxu0 0
      %496 = vmatprep.subr.bf16.mxu0 0
      %497 = vmatpush1.bf16.msra.mxu0 0
      %498 = vmatprep.subr.bf16.mxu0 0
      %499 = vmatpush1.bf16.msra.mxu0 0
      %500 = vmatprep.subr.bf16.mxu0 0
      %501 = vmatpush1.bf16.msra.mxu0 0
      %502 = vmatprep.subr.bf16.mxu0 0
      %503 = vmatpush1.bf16.msra.mxu0 0
      %504 = vmatprep.subr.bf16.mxu0 0
      %505 = vmatpush1.bf16.msra.mxu0 0
      %506 = vmatprep.subr.bf16.mxu0 0
      %507 = vmatpush1.bf16.msra.mxu0 0
      %508 = vmatprep.subr.bf16.mxu0 0
      %509 = vmatpush1.bf16.msra.mxu0 0
      %510 = vmatprep.subr.bf16.mxu0 0
      %511 = vmatpush1.bf16.msra.mxu0 0
      %512 = vmatprep.subr.bf16.mxu0 0
      %513 = vmatpush1.bf16.msra.mxu0 0
      %514 = vmatprep.subr.bf16.mxu0 0
      %515 = vmatpush1.bf16.msra.mxu0 0
      %516 = vmatprep.mubr.bf16.mxu0 0
      %517 = vmatmul.mubr.bf16.gmra.mrb[0].mxu0 %v432
      %v518 = vpop.f32.mrb[0].mxu0
      %v519 = vadd.f32 0.0, %v518
      %v520 = vpop.f32.mrb[0].mxu0
      %v521 = vpop.f32.mrb[0].mxu0
      %v522 = vpop.f32.mrb[0].mxu0
      %523 = vdwg.mxu0
      %v524 = vadd.f32 %v371, %v478
      %v525 = vadd.f32 %v373, %v480
      %v526 = vadd.f32 %v412, %v519
      %s527 = scalar_lea.vmem %s1, 12
      %v528 = vld [vmem:[%s527] sm:$0xf]
      %529 = vrot.lane.b32.xlu0 %v207, 104
      %v530 = vpop.permute.xlu0 %529
      %531 = vrot.lane.b32.xlu0 %v215, 104
      %v532 = vpop.permute.xlu0 %531
      %533 = vrot.lane.b32.xlu0 %v214, 104
      %v534 = vpop.permute.xlu0 %533
      %535 = vrot.lane.b32.xlu0 %v216, 104
      %v536 = vpop.permute.xlu0 %535
      %vm537 = vcmask 850944
      %v538 = vsel %vm537, %v530, %v532
      %v539 = vsel %vm537, %v532, %v534
      %v540 = vsel %vm537, %v534, %v536
      %v542 = vsel %vm229, %v528, 0
      %v545 = vsel %vm233, %v538, 0
      %v548 = vsel %vm233, %v539, 0
      %v551 = vsel %vm233, %v540, 0
      %553 = vmatprep.subr.bf16.mxu0 %v548
      %554 = vmatpush1.bf16.msra.mxu0 %v545
      %555 = vmatprep.subr.bf16.mxu0 0
      %556 = vmatpush1.bf16.msra.mxu0 0
      %557 = vmatprep.subr.bf16.mxu0 0
      %558 = vmatpush1.bf16.msra.mxu0 0
      %559 = vmatprep.subr.bf16.mxu0 0
      %560 = vmatpush1.bf16.msra.mxu0 0
      %561 = vmatprep.subr.bf16.mxu0 0
      %562 = vmatpush1.bf16.msra.mxu0 0
      %563 = vmatprep.subr.bf16.mxu0 0
      %564 = vmatpush1.bf16.msra.mxu0 0
      %565 = vmatprep.subr.bf16.mxu0 0
      %566 = vmatpush1.bf16.msra.mxu0 0
      %567 = vmatprep.subr.bf16.mxu0 0
      %568 = vmatpush1.bf16.msra.mxu0 0
      %569 = vmatprep.subr.bf16.mxu0 0
      %570 = vmatpush1.bf16.msra.mxu0 0
      %571 = vmatprep.subr.bf16.mxu0 0
      %572 = vmatpush1.bf16.msra.mxu0 0
      %573 = vmatprep.subr.bf16.mxu0 0
      %574 = vmatpush1.bf16.msra.mxu0 0
      %575 = vmatprep.subr.bf16.mxu0 0
      %576 = vmatpush1.bf16.msra.mxu0 0
      %577 = vmatprep.subr.bf16.mxu0 0
      %578 = vmatpush1.bf16.msra.mxu0 0
      %579 = vmatprep.subr.bf16.mxu0 0
      %580 = vmatpush1.bf16.msra.mxu0 0
      %581 = vmatprep.subr.bf16.mxu0 0
      %582 = vmatpush1.bf16.msra.mxu0 0
      %583 = vmatprep.subr.bf16.mxu0 0
      %584 = vmatpush1.bf16.msra.mxu0 0
      %585 = vmatprep.mubr.bf16.mxu0 0
      %586 = vmatmul.mubr.bf16.gmra.mrb[0].mxu0 %v542
      %v587 = vpop.f32.mrb[0].mxu0
      %v588 = vadd.f32 0.0, %v587
      %v589 = vpop.f32.mrb[0].mxu0
      %v590 = vadd.f32 0.0, %v589
      %v591 = vpop.f32.mrb[0].mxu0
      %v592 = vpop.f32.mrb[0].mxu0
      %593 = vdwg.mxu0
      %594 = vmatprep.subr.bf16.mxu0 0
      %595 = vmatpush1.bf16.msra.mxu0 %v551
      %596 = vmatprep.subr.bf16.mxu0 0
      %597 = vmatpush1.bf16.msra.mxu0 0
      %598 = vmatprep.subr.bf16.mxu0 0
      %599 = vmatpush1.bf16.msra.mxu0 0
      %600 = vmatprep.subr.bf16.mxu0 0
      %601 = vmatpush1.bf16.msra.mxu0 0
      %602 = vmatprep.subr.bf16.mxu0 0
      %603 = vmatpush1.bf16.msra.mxu0 0
      %604 = vmatprep.subr.bf16.mxu0 0
      %605 = vmatpush1.bf16.msra.mxu0 0
      %606 = vmatprep.subr.bf16.mxu0 0
      %607 = vmatpush1.bf16.msra.mxu0 0
      %608 = vmatprep.subr.bf16.mxu0 0
      %609 = vmatpush1.bf16.msra.mxu0 0
      %610 = vmatprep.subr.bf16.mxu0 0
      %611 = vmatpush1.bf16.msra.mxu0 0
      %612 = vmatprep.subr.bf16.mxu0 0
      %613 = vmatpush1.bf16.msra.mxu0 0
      %614 = vmatprep.subr.bf16.mxu0 0
      %615 = vmatpush1.bf16.msra.mxu0 0
      %616 = vmatprep.subr.bf16.mxu0 0
      %617 = vmatpush1.bf16.msra.mxu0 0
      %618 = vmatprep.subr.bf16.mxu0 0
      %619 = vmatpush1.bf16.msra.mxu0 0
      %620 = vmatprep.subr.bf16.mxu0 0
      %621 = vmatpush1.bf16.msra.mxu0 0
      %622 = vmatprep.subr.bf16.mxu0 0
      %623 = vmatpush1.bf16.msra.mxu0 0
      %624 = vmatprep.subr.bf16.mxu0 0
      %625 = vmatpush1.bf16.msra.mxu0 0
      %626 = vmatprep.mubr.bf16.mxu0 0
      %627 = vmatmul.mubr.bf16.gmra.mrb[0].mxu0 %v542
      %v628 = vpop.f32.mrb[0].mxu0
      %v629 = vadd.f32 0.0, %v628
      %v630 = vpop.f32.mrb[0].mxu0
      %v631 = vpop.f32.mrb[0].mxu0
      %v632 = vpop.f32.mrb[0].mxu0
      %633 = vdwg.mxu0
      %v634 = vadd.f32 %v524, %v588
      %v635 = vadd.f32 %v525, %v590
      %v636 = vadd.f32 %v526, %v629
      %s637 = scalar_lea.vmem %s1, 16
      %v638 = vld [vmem:[%s637] sm:$0xf]
      %639 = vrot.lane.b32.xlu0 %v207, 103
      %v640 = vpop.permute.xlu0 %639
      %641 = vrot.lane.b32.xlu0 %v215, 103
      %v642 = vpop.permute.xlu0 %641
      %643 = vrot.lane.b32.xlu0 %v214, 103
      %v644 = vpop.permute.xlu0 %643
      %645 = vrot.lane.b32.xlu0 %v216, 103
      %v646 = vpop.permute.xlu0 %645
      %vm647 = vcmask 842752
      %v648 = vsel %vm647, %v640, %v642
      %v649 = vsel %vm647, %v642, %v644
      %v650 = vsel %vm647, %v644, %v646
      %v652 = vsel %vm229, %v638, 0
      %v655 = vsel %vm233, %v648, 0
      %v658 = vsel %vm233, %v649, 0
      %v661 = vsel %vm233, %v650, 0
      %663 = vmatprep.subr.bf16.mxu0 %v658
      %664 = vmatpush1.bf16.msra.mxu0 %v655
      %665 = vmatprep.subr.bf16.mxu0 0
      %666 = vmatpush1.bf16.msra.mxu0 0
      %667 = vmatprep.subr.bf16.mxu0 0
      %668 = vmatpush1.bf16.msra.mxu0 0
      %669 = vmatprep.subr.bf16.mxu0 0
      %670 = vmatpush1.bf16.msra.mxu0 0
      %671 = vmatprep.subr.bf16.mxu0 0
      %672 = vmatpush1.bf16.msra.mxu0 0
      %673 = vmatprep.subr.bf16.mxu0 0
      %674 = vmatpush1.bf16.msra.mxu0 0
      %675 = vmatprep.subr.bf16.mxu0 0
      %676 = vmatpush1.bf16.msra.mxu0 0
      %677 = vmatprep.subr.bf16.mxu0 0
      %678 = vmatpush1.bf16.msra.mxu0 0
      %679 = vmatprep.subr.bf16.mxu0 0
      %680 = vmatpush1.bf16.msra.mxu0 0
      %681 = vmatprep.subr.bf16.mxu0 0
      %682 = vmatpush1.bf16.msra.mxu0 0
      %683 = vmatprep.subr.bf16.mxu0 0
      %684 = vmatpush1.bf16.msra.mxu0 0
      %685 = vmatprep.subr.bf16.mxu0 0
      %686 = vmatpush1.bf16.msra.mxu0 0
      %687 = vmatprep.subr.bf16.mxu0 0
      %688 = vmatpush1.bf16.msra.mxu0 0
      %689 = vmatprep.subr.bf16.mxu0 0
      %690 = vmatpush1.bf16.msra.mxu0 0
      %691 = vmatprep.subr.bf16.mxu0 0
      %692 = vmatpush1.bf16.msra.mxu0 0
      %693 = vmatprep.subr.bf16.mxu0 0
      %694 = vmatpush1.bf16.msra.mxu0 0
      %695 = vmatprep.mubr.bf16.mxu0 0
      %696 = vmatmul.mubr.bf16.gmra.mrb[0].mxu0 %v652
      %v697 = vpop.f32.mrb[0].mxu0
      %v698 = vadd.f32 0.0, %v697
      %v699 = vpop.f32.mrb[0].mxu0
      %v700 = vadd.f32 0.0, %v699
      %v701 = vpop.f32.mrb[0].mxu0
      %v702 = vpop.f32.mrb[0].mxu0
      %703 = vdwg.mxu0
      %704 = vmatprep.subr.bf16.mxu0 0
      %705 = vmatpush1.bf16.msra.mxu0 %v661
      %706 = vmatprep.subr.bf16.mxu0 0
      %707 = vmatpush1.bf16.msra.mxu0 0
      %708 = vmatprep.subr.bf16.mxu0 0
      %709 = vmatpush1.bf16.msra.mxu0 0
      %710 = vmatprep.subr.bf16.mxu0 0
      %711 = vmatpush1.bf16.msra.mxu0 0
      %712 = vmatprep.subr.bf16.mxu0 0
      %713 = vmatpush1.bf16.msra.mxu0 0
      %714 = vmatprep.subr.bf16.mxu0 0
      %715 = vmatpush1.bf16.msra.mxu0 0
      %716 = vmatprep.subr.bf16.mxu0 0
      %717 = vmatpush1.bf16.msra.mxu0 0
      %718 = vmatprep.subr.bf16.mxu0 0
      %719 = vmatpush1.bf16.msra.mxu0 0
      %720 = vmatprep.subr.bf16.mxu0 0
      %721 = vmatpush1.bf16.msra.mxu0 0
      %722 = vmatprep.subr.bf16.mxu0 0
      %723 = vmatpush1.bf16.msra.mxu0 0
      %724 = vmatprep.subr.bf16.mxu0 0
      %725 = vmatpush1.bf16.msra.mxu0 0
      %726 = vmatprep.subr.bf16.mxu0 0
      %727 = vmatpush1.bf16.msra.mxu0 0
      %728 = vmatprep.subr.bf16.mxu0 0
      %729 = vmatpush1.bf16.msra.mxu0 0
      %730 = vmatprep.subr.bf16.mxu0 0
      %731 = vmatpush1.bf16.msra.mxu0 0
      %732 = vmatprep.subr.bf16.mxu0 0
      %733 = vmatpush1.bf16.msra.mxu0 0
      %734 = vmatprep.subr.bf16.mxu0 0
      %735 = vmatpush1.bf16.msra.mxu0 0
      %736 = vmatprep.mubr.bf16.mxu0 0
      %737 = vmatmul.mubr.bf16.gmra.mrb[0].mxu0 %v652
      %v738 = vpop.f32.mrb[0].mxu0
      %v739 = vadd.f32 0.0, %v738
      %v740 = vpop.f32.mrb[0].mxu0
      %v741 = vpop.f32.mrb[0].mxu0
      %v742 = vpop.f32.mrb[0].mxu0
      %743 = vdwg.mxu0
      %v744 = vadd.f32 %v634, %v698
      %v745 = vadd.f32 %v635, %v700
      %v746 = vadd.f32 %v636, %v739
      %s747 = scalar_lea.vmem %s1, 20
      %v748 = vld [vmem:[%s747] sm:$0xf]
      %749 = vrot.lane.b32.xlu0 %v207, 102
      %v750 = vpop.permute.xlu0 %749
      %751 = vrot.lane.b32.xlu0 %v215, 102
      %v752 = vpop.permute.xlu0 %751
      %753 = vrot.lane.b32.xlu0 %v214, 102
      %v754 = vpop.permute.xlu0 %753
      %755 = vrot.lane.b32.xlu0 %v216, 102
      %v756 = vpop.permute.xlu0 %755
      %vm757 = vcmask 834560
      %v758 = vsel %vm757, %v750, %v752
      %v759 = vsel %vm757, %v752, %v754
      %v760 = vsel %vm757, %v754, %v756
      %v762 = vsel %vm229, %v748, 0
      %v765 = vsel %vm233, %v758, 0
      %v768 = vsel %vm233, %v759, 0
      %v771 = vsel %vm233, %v760, 0
      %773 = vmatprep.subr.bf16.mxu0 %v768
      %774 = vmatpush1.bf16.msra.mxu0 %v765
      %775 = vmatprep.subr.bf16.mxu0 0
      %776 = vmatpush1.bf16.msra.mxu0 0
      %777 = vmatprep.subr.bf16.mxu0 0
      %778 = vmatpush1.bf16.msra.mxu0 0
      %779 = vmatprep.subr.bf16.mxu0 0
      %780 = vmatpush1.bf16.msra.mxu0 0
      %781 = vmatprep.subr.bf16.mxu0 0
      %782 = vmatpush1.bf16.msra.mxu0 0
      %783 = vmatprep.subr.bf16.mxu0 0
      %784 = vmatpush1.bf16.msra.mxu0 0
      %785 = vmatprep.subr.bf16.mxu0 0
      %786 = vmatpush1.bf16.msra.mxu0 0
      %787 = vmatprep.subr.bf16.mxu0 0
      %788 = vmatpush1.bf16.msra.mxu0 0
      %789 = vmatprep.subr.bf16.mxu0 0
      %790 = vmatpush1.bf16.msra.mxu0 0
      %791 = vmatprep.subr.bf16.mxu0 0
      %792 = vmatpush1.bf16.msra.mxu0 0
      %793 = vmatprep.subr.bf16.mxu0 0
      %794 = vmatpush1.bf16.msra.mxu0 0
      %795 = vmatprep.subr.bf16.mxu0 0
      %796 = vmatpush1.bf16.msra.mxu0 0
      %797 = vmatprep.subr.bf16.mxu0 0
      %798 = vmatpush1.bf16.msra.mxu0 0
      %799 = vmatprep.subr.bf16.mxu0 0
      %800 = vmatpush1.bf16.msra.mxu0 0
      %801 = vmatprep.subr.bf16.mxu0 0
      %802 = vmatpush1.bf16.msra.mxu0 0
      %803 = vmatprep.subr.bf16.mxu0 0
      %804 = vmatpush1.bf16.msra.mxu0 0
      %805 = vmatprep.mubr.bf16.mxu0 0
      %806 = vmatmul.mubr.bf16.gmra.mrb[0].mxu0 %v762
      %v807 = vpop.f32.mrb[0].mxu0
      %v808 = vadd.f32 0.0, %v807
      %v809 = vpop.f32.mrb[0].mxu0
      %v810 = vadd.f32 0.0, %v809
      %v811 = vpop.f32.mrb[0].mxu0
      %v812 = vpop.f32.mrb[0].mxu0
      %813 = vdwg.mxu0
      %814 = vmatprep.subr.bf16.mxu0 0
      %815 = vmatpush1.bf16.msra.mxu0 %v771
      %816 = vmatprep.subr.bf16.mxu0 0
      %817 = vmatpush1.bf16.msra.mxu0 0
      %818 = vmatprep.subr.bf16.mxu0 0
      %819 = vmatpush1.bf16.msra.mxu0 0
      %820 = vmatprep.subr.bf16.mxu0 0
      %821 = vmatpush1.bf16.msra.mxu0 0
      %822 = vmatprep.subr.bf16.mxu0 0
      %823 = vmatpush1.bf16.msra.mxu0 0
      %824 = vmatprep.subr.bf16.mxu0 0
      %825 = vmatpush1.bf16.msra.mxu0 0
      %826 = vmatprep.subr.bf16.mxu0 0
      %827 = vmatpush1.bf16.msra.mxu0 0
      %828 = vmatprep.subr.bf16.mxu0 0
      %829 = vmatpush1.bf16.msra.mxu0 0
      %830 = vmatprep.subr.bf16.mxu0 0
      %831 = vmatpush1.bf16.msra.mxu0 0
      %832 = vmatprep.subr.bf16.mxu0 0
      %833 = vmatpush1.bf16.msra.mxu0 0
      %834 = vmatprep.subr.bf16.mxu0 0
      %835 = vmatpush1.bf16.msra.mxu0 0
      %836 = vmatprep.subr.bf16.mxu0 0
      %837 = vmatpush1.bf16.msra.mxu0 0
      %838 = vmatprep.subr.bf16.mxu0 0
      %839 = vmatpush1.bf16.msra.mxu0 0
      %840 = vmatprep.subr.bf16.mxu0 0
      %841 = vmatpush1.bf16.msra.mxu0 0
      %842 = vmatprep.subr.bf16.mxu0 0
      %843 = vmatpush1.bf16.msra.mxu0 0
      %844 = vmatprep.subr.bf16.mxu0 0
      %845 = vmatpush1.bf16.msra.mxu0 0
      %846 = vmatprep.mubr.bf16.mxu0 0
      %847 = vmatmul.mubr.bf16.gmra.mrb[0].mxu0 %v762
      %v848 = vpop.f32.mrb[0].mxu0
      %v849 = vadd.f32 0.0, %v848
      %v850 = vpop.f32.mrb[0].mxu0
      %v851 = vpop.f32.mrb[0].mxu0
      %v852 = vpop.f32.mrb[0].mxu0
      %853 = vdwg.mxu0
      %v854 = vadd.f32 %v744, %v808
      %v855 = vadd.f32 %v745, %v810
      %v856 = vadd.f32 %v746, %v849
      %s857 = scalar_lea.vmem %s1, 24
      %v858 = vld [vmem:[%s857] sm:$0xf]
      %859 = vrot.lane.b32.xlu0 %v207, 80
      %v860 = vpop.permute.xlu0 %859
      %861 = vrot.lane.b32.xlu0 %v215, 80
      %v862 = vpop.permute.xlu0 %861
      %863 = vrot.lane.b32.xlu0 %v214, 80
      %v864 = vpop.permute.xlu0 %863
      %865 = vrot.lane.b32.xlu0 %v216, 80
      %v866 = vpop.permute.xlu0 %865
      %vm867 = vcmask 654336
      %v868 = vsel %vm867, %v860, %v862
      %v869 = vsel %vm867, %v862, %v864
      %v870 = vsel %vm867, %v864, %v866
      %v872 = vsel %vm229, %v858, 0
      %v875 = vsel %vm233, %v868, 0
      %v878 = vsel %vm233, %v869, 0
      %v881 = vsel %vm233, %v870, 0
      %883 = vmatprep.subr.bf16.mxu0 %v878
      %884 = vmatpush1.bf16.msra.mxu0 %v875
      %885 = vmatprep.subr.bf16.mxu0 0
      %886 = vmatpush1.bf16.msra.mxu0 0
      %887 = vmatprep.subr.bf16.mxu0 0
      %888 = vmatpush1.bf16.msra.mxu0 0
      %889 = vmatprep.subr.bf16.mxu0 0
      %890 = vmatpush1.bf16.msra.mxu0 0
      %891 = vmatprep.subr.bf16.mxu0 0
      %892 = vmatpush1.bf16.msra.mxu0 0
      %893 = vmatprep.subr.bf16.mxu0 0
      %894 = vmatpush1.bf16.msra.mxu0 0
      %895 = vmatprep.subr.bf16.mxu0 0
      %896 = vmatpush1.bf16.msra.mxu0 0
      %897 = vmatprep.subr.bf16.mxu0 0
      %898 = vmatpush1.bf16.msra.mxu0 0
      %899 = vmatprep.subr.bf16.mxu0 0
      %900 = vmatpush1.bf16.msra.mxu0 0
      %901 = vmatprep.subr.bf16.mxu0 0
      %902 = vmatpush1.bf16.msra.mxu0 0
      %903 = vmatprep.subr.bf16.mxu0 0
      %904 = vmatpush1.bf16.msra.mxu0 0
      %905 = vmatprep.subr.bf16.mxu0 0
      %906 = vmatpush1.bf16.msra.mxu0 0
      %907 = vmatprep.subr.bf16.mxu0 0
      %908 = vmatpush1.bf16.msra.mxu0 0
      %909 = vmatprep.subr.bf16.mxu0 0
      %910 = vmatpush1.bf16.msra.mxu0 0
      %911 = vmatprep.subr.bf16.mxu0 0
      %912 = vmatpush1.bf16.msra.mxu0 0
      %913 = vmatprep.subr.bf16.mxu0 0
      %914 = vmatpush1.bf16.msra.mxu0 0
      %915 = vmatprep.mubr.bf16.mxu0 0
      %916 = vmatmul.mubr.bf16.gmra.mrb[0].mxu0 %v872
      %v917 = vpop.f32.mrb[0].mxu0
      %v918 = vadd.f32 0.0, %v917
      %v919 = vpop.f32.mrb[0].mxu0
      %v920 = vadd.f32 0.0, %v919
      %v921 = vpop.f32.mrb[0].mxu0
      %v922 = vpop.f32.mrb[0].mxu0
      %923 = vdwg.mxu0
      %924 = vmatprep.subr.bf16.mxu0 0
      %925 = vmatpush1.bf16.msra.mxu0 %v881
      %926 = vmatprep.subr.bf16.mxu0 0
      %927 = vmatpush1.bf16.msra.mxu0 0
      %928 = vmatprep.subr.bf16.mxu0 0
      %929 = vmatpush1.bf16.msra.mxu0 0
      %930 = vmatprep.subr.bf16.mxu0 0
      %931 = vmatpush1.bf16.msra.mxu0 0
      %932 = vmatprep.subr.bf16.mxu0 0
      %933 = vmatpush1.bf16.msra.mxu0 0
      %934 = vmatprep.subr.bf16.mxu0 0
      %935 = vmatpush1.bf16.msra.mxu0 0
      %936 = vmatprep.subr.bf16.mxu0 0
      %937 = vmatpush1.bf16.msra.mxu0 0
      %938 = vmatprep.subr.bf16.mxu0 0
      %939 = vmatpush1.bf16.msra.mxu0 0
      %940 = vmatprep.subr.bf16.mxu0 0
      %941 = vmatpush1.bf16.msra.mxu0 0
      %942 = vmatprep.subr.bf16.mxu0 0
      %943 = vmatpush1.bf16.msra.mxu0 0
      %944 = vmatprep.subr.bf16.mxu0 0
      %945 = vmatpush1.bf16.msra.mxu0 0
      %946 = vmatprep.subr.bf16.mxu0 0
      %947 = vmatpush1.bf16.msra.mxu0 0
      %948 = vmatprep.subr.bf16.mxu0 0
      %949 = vmatpush1.bf16.msra.mxu0 0
      %950 = vmatprep.subr.bf16.mxu0 0
      %951 = vmatpush1.bf16.msra.mxu0 0
      %952 = vmatprep.subr.bf16.mxu0 0
      %953 = vmatpush1.bf16.msra.mxu0 0
      %954 = vmatprep.subr.bf16.mxu0 0
      %955 = vmatpush1.bf16.msra.mxu0 0
      %956 = vmatprep.mubr.bf16.mxu0 0
      %957 = vmatmul.mubr.bf16.gmra.mrb[0].mxu0 %v872
      %v958 = vpop.f32.mrb[0].mxu0
      %v959 = vadd.f32 0.0, %v958
      %v960 = vpop.f32.mrb[0].mxu0
      %v961 = vpop.f32.mrb[0].mxu0
      %v962 = vpop.f32.mrb[0].mxu0
      %963 = vdwg.mxu0
      %v964 = vadd.f32 %v854, %v918
      %v965 = vadd.f32 %v855, %v920
      %v966 = vadd.f32 %v856, %v959
      %s967 = scalar_lea.vmem %s1, 28
      %v968 = vld [vmem:[%s967] sm:$0xf]
      %969 = vrot.lane.b32.xlu0 %v207, 79
      %v970 = vpop.permute.xlu0 %969
      %971 = vrot.lane.b32.xlu0 %v215, 79
      %v972 = vpop.permute.xlu0 %971
      %973 = vrot.lane.b32.xlu0 %v214, 79
      %v974 = vpop.permute.xlu0 %973
      %975 = vrot.lane.b32.xlu0 %v216, 79
      %v976 = vpop.permute.xlu0 %975
      %vm977 = vcmask 646144
      %v978 = vsel %vm977, %v970, %v972
      %v979 = vsel %vm977, %v972, %v974
      %v980 = vsel %vm977, %v974, %v976
      %v982 = vsel %vm229, %v968, 0
      %v985 = vsel %vm233, %v978, 0
      %v988 = vsel %vm233, %v979, 0
      %v991 = vsel %vm233, %v980, 0
      %993 = vmatprep.subr.bf16.mxu0 %v988
      %994 = vmatpush1.bf16.msra.mxu0 %v985
      %995 = vmatprep.subr.bf16.mxu0 0
      %996 = vmatpush1.bf16.msra.mxu0 0
      %997 = vmatprep.subr.bf16.mxu0 0
      %998 = vmatpush1.bf16.msra.mxu0 0
      %999 = vmatprep.subr.bf16.mxu0 0
      %1000 = vmatpush1.bf16.msra.mxu0 0
      %1001 = vmatprep.subr.bf16.mxu0 0
      %1002 = vmatpush1.bf16.msra.mxu0 0
      %1003 = vmatprep.subr.bf16.mxu0 0
      %1004 = vmatpush1.bf16.msra.mxu0 0
      %1005 = vmatprep.subr.bf16.mxu0 0
      %1006 = vmatpush1.bf16.msra.mxu0 0
      %1007 = vmatprep.subr.bf16.mxu0 0
      %1008 = vmatpush1.bf16.msra.mxu0 0
      %1009 = vmatprep.subr.bf16.mxu0 0
      %1010 = vmatpush1.bf16.msra.mxu0 0
      %1011 = vmatprep.subr.bf16.mxu0 0
      %1012 = vmatpush1.bf16.msra.mxu0 0
      %1013 = vmatprep.subr.bf16.mxu0 0
      %1014 = vmatpush1.bf16.msra.mxu0 0
      %1015 = vmatprep.subr.bf16.mxu0 0
      %1016 = vmatpush1.bf16.msra.mxu0 0
      %1017 = vmatprep.subr.bf16.mxu0 0
      %1018 = vmatpush1.bf16.msra.mxu0 0
      %1019 = vmatprep.subr.bf16.mxu0 0
      %1020 = vmatpush1.bf16.msra.mxu0 0
      %1021 = vmatprep.subr.bf16.mxu0 0
      %1022 = vmatpush1.bf16.msra.mxu0 0
      %1023 = vmatprep.subr.bf16.mxu0 0
      %1024 = vmatpush1.bf16.msra.mxu0 0
      %1025 = vmatprep.mubr.bf16.mxu0 0
      %1026 = vmatmul.mubr.bf16.gmra.mrb[0].mxu0 %v982
      %v1027 = vpop.f32.mrb[0].mxu0
      %v1028 = vadd.f32 0.0, %v1027
      %v1029 = vpop.f32.mrb[0].mxu0
      %v1030 = vadd.f32 0.0, %v1029
      %v1031 = vpop.f32.mrb[0].mxu0
      %v1032 = vpop.f32.mrb[0].mxu0
      %1033 = vdwg.mxu0
      %1034 = vmatprep.subr.bf16.mxu0 0
      %1035 = vmatpush1.bf16.msra.mxu0 %v991
      %1036 = vmatprep.subr.bf16.mxu0 0
      %1037 = vmatpush1.bf16.msra.mxu0 0
      %1038 = vmatprep.subr.bf16.mxu0 0
      %1039 = vmatpush1.bf16.msra.mxu0 0
      %1040 = vmatprep.subr.bf16.mxu0 0
      %1041 = vmatpush1.bf16.msra.mxu0 0
      %1042 = vmatprep.subr.bf16.mxu0 0
      %1043 = vmatpush1.bf16.msra.mxu0 0
      %1044 = vmatprep.subr.bf16.mxu0 0
      %1045 = vmatpush1.bf16.msra.mxu0 0
      %1046 = vmatprep.subr.bf16.mxu0 0
      %1047 = vmatpush1.bf16.msra.mxu0 0
      %1048 = vmatprep.subr.bf16.mxu0 0
      %1049 = vmatpush1.bf16.msra.mxu0 0
      %1050 = vmatprep.subr.bf16.mxu0 0
      %1051 = vmatpush1.bf16.msra.mxu0 0
      %1052 = vmatprep.subr.bf16.mxu0 0
      %1053 = vmatpush1.bf16.msra.mxu0 0
      %1054 = vmatprep.subr.bf16.mxu0 0
      %1055 = vmatpush1.bf16.msra.mxu0 0
      %1056 = vmatprep.subr.bf16.mxu0 0
      %1057 = vmatpush1.bf16.msra.mxu0 0
      %1058 = vmatprep.subr.bf16.mxu0 0
      %1059 = vmatpush1.bf16.msra.mxu0 0
      %1060 = vmatprep.subr.bf16.mxu0 0
      %1061 = vmatpush1.bf16.msra.mxu0 0
      %1062 = vmatprep.subr.bf16.mxu0 0
      %1063 = vmatpush1.bf16.msra.mxu0 0
      %1064 = vmatprep.subr.bf16.mxu0 0
      %1065 = vmatpush1.bf16.msra.mxu0 0
      %1066 = vmatprep.mubr.bf16.mxu0 0
      %1067 = vmatmul.mubr.bf16.gmra.mrb[0].mxu0 %v982
      %v1068 = vpop.f32.mrb[0].mxu0
      %v1069 = vadd.f32 0.0, %v1068
      %v1070 = vpop.f32.mrb[0].mxu0
      %v1071 = vpop.f32.mrb[0].mxu0
      %v1072 = vpop.f32.mrb[0].mxu0
      %1073 = vdwg.mxu0
      %v1074 = vadd.f32 %v964, %v1028
      %v1075 = vadd.f32 %v965, %v1030
      %v1076 = vadd.f32 %v966, %v1069
      %s1077 = scalar_lea.vmem %s1, 32
      %v1078 = vld [vmem:[%s1077] sm:$0xf]
      %1079 = vrot.lane.b32.xlu0 %v207, 78
      %v1080 = vpop.permute.xlu0 %1079
      %1081 = vrot.lane.b32.xlu0 %v215, 78
      %v1082 = vpop.permute.xlu0 %1081
      %1083 = vrot.lane.b32.xlu0 %v214, 78
      %v1084 = vpop.permute.xlu0 %1083
      %1085 = vrot.lane.b32.xlu0 %v216, 78
      %v1086 = vpop.permute.xlu0 %1085
      %vm1087 = vcmask 637952
      %v1088 = vsel %vm1087, %v1080, %v1082
      %v1089 = vsel %vm1087, %v1082, %v1084
      %v1090 = vsel %vm1087, %v1084, %v1086
      %v1092 = vsel %vm229, %v1078, 0
      %v1095 = vsel %vm233, %v1088, 0
      %v1098 = vsel %vm233, %v1089, 0
      %v1101 = vsel %vm233, %v1090, 0
      %1103 = vmatprep.subr.bf16.mxu0 %v1098
      %1104 = vmatpush1.bf16.msra.mxu0 %v1095
      %1105 = vmatprep.subr.bf16.mxu0 0
      %1106 = vmatpush1.bf16.msra.mxu0 0
      %1107 = vmatprep.subr.bf16.mxu0 0
      %1108 = vmatpush1.bf16.msra.mxu0 0
      %1109 = vmatprep.subr.bf16.mxu0 0
      %1110 = vmatpush1.bf16.msra.mxu0 0
      %1111 = vmatprep.subr.bf16.mxu0 0
      %1112 = vmatpush1.bf16.msra.mxu0 0
      %1113 = vmatprep.subr.bf16.mxu0 0
      %1114 = vmatpush1.bf16.msra.mxu0 0
      %1115 = vmatprep.subr.bf16.mxu0 0
      %1116 = vmatpush1.bf16.msra.mxu0 0
      %1117 = vmatprep.subr.bf16.mxu0 0
      %1118 = vmatpush1.bf16.msra.mxu0 0
      %1119 = vmatprep.subr.bf16.mxu0 0
      %1120 = vmatpush1.bf16.msra.mxu0 0
      %1121 = vmatprep.subr.bf16.mxu0 0
      %1122 = vmatpush1.bf16.msra.mxu0 0
      %1123 = vmatprep.subr.bf16.mxu0 0
      %1124 = vmatpush1.bf16.msra.mxu0 0
      %1125 = vmatprep.subr.bf16.mxu0 0
      %1126 = vmatpush1.bf16.msra.mxu0 0
      %1127 = vmatprep.subr.bf16.mxu0 0
      %1128 = vmatpush1.bf16.msra.mxu0 0
      %1129 = vmatprep.subr.bf16.mxu0 0
      %1130 = vmatpush1.bf16.msra.mxu0 0
      %1131 = vmatprep.subr.bf16.mxu0 0
      %1132 = vmatpush1.bf16.msra.mxu0 0
      %1133 = vmatprep.subr.bf16.mxu0 0
      %1134 = vmatpush1.bf16.msra.mxu0 0
      %1135 = vmatprep.mubr.bf16.mxu0 0
      %1136 = vmatmul.mubr.bf16.gmra.mrb[0].mxu0 %v1092
      %v1137 = vpop.f32.mrb[0].mxu0
      %v1138 = vadd.f32 0.0, %v1137
      %v1139 = vpop.f32.mrb[0].mxu0
      %v1140 = vadd.f32 0.0, %v1139
      %v1141 = vpop.f32.mrb[0].mxu0
      %v1142 = vpop.f32.mrb[0].mxu0
      %1143 = vdwg.mxu0
      %1144 = vmatprep.subr.bf16.mxu0 0
      %1145 = vmatpush1.bf16.msra.mxu0 %v1101
      %1146 = vmatprep.subr.bf16.mxu0 0
      %1147 = vmatpush1.bf16.msra.mxu0 0
      %1148 = vmatprep.subr.bf16.mxu0 0
      %1149 = vmatpush1.bf16.msra.mxu0 0
      %1150 = vmatprep.subr.bf16.mxu0 0
      %1151 = vmatpush1.bf16.msra.mxu0 0
      %1152 = vmatprep.subr.bf16.mxu0 0
      %1153 = vmatpush1.bf16.msra.mxu0 0
      %1154 = vmatprep.subr.bf16.mxu0 0
      %1155 = vmatpush1.bf16.msra.mxu0 0
      %1156 = vmatprep.subr.bf16.mxu0 0
      %1157 = vmatpush1.bf16.msra.mxu0 0
      %1158 = vmatprep.subr.bf16.mxu0 0
      %1159 = vmatpush1.bf16.msra.mxu0 0
      %1160 = vmatprep.subr.bf16.mxu0 0
      %1161 = vmatpush1.bf16.msra.mxu0 0
      %1162 = vmatprep.subr.bf16.mxu0 0
      %1163 = vmatpush1.bf16.msra.mxu0 0
      %1164 = vmatprep.subr.bf16.mxu0 0
      %1165 = vmatpush1.bf16.msra.mxu0 0
      %1166 = vmatprep.subr.bf16.mxu0 0
      %1167 = vmatpush1.bf16.msra.mxu0 0
      %1168 = vmatprep.subr.bf16.mxu0 0
      %1169 = vmatpush1.bf16.msra.mxu0 0
      %1170 = vmatprep.subr.bf16.mxu0 0
      %1171 = vmatpush1.bf16.msra.mxu0 0
      %1172 = vmatprep.subr.bf16.mxu0 0
      %1173 = vmatpush1.bf16.msra.mxu0 0
      %1174 = vmatprep.subr.bf16.mxu0 0
      %1175 = vmatpush1.bf16.msra.mxu0 0
      %1176 = vmatprep.mubr.bf16.mxu0 0
      %1177 = vmatmul.mubr.bf16.gmra.mrb[0].mxu0 %v1092
      %v1178 = vpop.f32.mrb[0].mxu0
      %v1179 = vadd.f32 0.0, %v1178
      %v1180 = vpop.f32.mrb[0].mxu0
      %v1181 = vpop.f32.mrb[0].mxu0
      %v1182 = vpop.f32.mrb[0].mxu0
      %1183 = vdwg.mxu0
      %v1184 = vadd.f32 %v1074, %v1138
      %v1185 = vadd.f32 %v1075, %v1140
      %v1186 = vadd.f32 %v1076, %v1179
      %v1187 = vld [vmem:[%s2] sm:$0xff]
      %1189 = vset.pattern.permute.xlu0 0
      %1190 = vperm.xlu0 %1189, %v1187
      %v1191 = vpop.permute.xlu0 %1190
      %v1193 = vadd.f32 %v1184, %v1191
      %v1194 = vadd.f32 %v1185, %v1191
      %v1195 = vadd.f32 %v1186, %v1191
      %vm1196 = vcmp.gt.f32.partialorder %v1193, 0.0
      %vm1197 = vcmp.gt.f32.partialorder %v1194, 0.0
      %vm1198 = vcmp.gt.f32.partialorder %v1195, 0.0
      %v1199 = vmin.f32 %v1193, 0.0
      %v1200 = vmin.f32 %v1194, 0.0
      %v1201 = vmin.f32 %v1195, 0.0
      %v1202 = vmul.f32 %v1199, 1.442695
      %v1203 = vpow.pop %v1202
      %v1204 = vmul.f32 %v1200, 1.442695
      %v1205 = vpow.pop %v1204
      %v1206 = vmul.f32 %v1201, 1.442695
      %v1207 = vpow.pop %v1206
      %v1208 = vsub.f32 %v1203, 1.0
      %v1209 = vsub.f32 %v1205, 1.0
      %v1210 = vsub.f32 %v1207, 1.0
      %v1211 = vsel %vm1196, %v1193, %v1208
      %v1212 = vsel %vm1197, %v1194, %v1209
      %v1213 = vsel %vm1198, %v1195, %v1210
      %1214 = vst [vmem:[%s192] sm:$0xff] %v1211
      %1215 = vst [vmem:[%s192 + $0x8] sm:$0xff] %v1212
      %1216 = vst [vmem:[%s192 + $0x10] sm:$0xff] %v1213
      %s1217 = smul.u32 3, %s19
      %p1218 = scmp.lt.s32.totalorder %s18, 1
      %s1219 = scalar_select %p1218, %s18, 1
      %p1220 = scmp.lt.s32.totalorder %s1217, 2
      %s1221 = scalar_select %p1220, %s1217, 2
      %s1222 = smul.addr %s1219, 3
      %s1223 = sadd.s32 %s1221, %s1222
      %s1224 = smul.addr %s1223, 8
      %s1225 = scalar_lea.vmem %s3, %s1224
      // Predicated region
      $region33: #{conv_block_forward.1} parent=31 // pred_check
        %p1226 = pneg %p114
      $region34: #{conv_block_forward.1} parent=31 // pred_check_branch
        %1228 = sbr.rel (%p1226) target = $region36
      $region35: #{conv_block_forward.1} parent=31 // pred_region
        %s1229 = smul.u32 3, %s19
      $region36: #{conv_block_forward.1} parent=31 // pred_fallthru
        _
    $region32: #{conv_block_forward.1} parent=5 // pred_fallthru
      _
    %p1230 = scmp.le.s32.totalorder 2, %s9
    // Predicated region
    $region37: #{conv_block_forward.1} parent=5 // pred_check
      %p1231 = pneg %p1230
    $region38: #{conv_block_forward.1} parent=5 // pred_check_branch
      %1233 = sbr.rel (%p1231) target = $region40
    $region39: #{conv_block_forward.1} parent=5 // pred_region
      %s1234 = ssub.s32 %s9, 2
      // Predicated region
      $region41: #{conv_block_forward.1} parent=39 // pred_check
        %p1235 = pneg %p120
      $region42: #{conv_block_forward.1} parent=39 // pred_check_branch
        %1237 = sbr.rel (%p1235) target = $region44
      $region43: #{conv_block_forward.1} parent=39 // pred_region
        %s1238 = smul.u32 3, %s21
        %p1239 = scmp.lt.s32.totalorder %s20, 1
        %s1240 = scalar_select %p1239, %s20, 1
        %p1241 = scmp.lt.s32.totalorder %s1238, 2
        %s1242 = scalar_select %p1241, %s1238, 2
        %s1243 = smul.addr %s1240, 3
        %s1244 = sadd.s32 %s1242, %s1243
        %s1245 = smul.addr %s1244, 8
        %s1246 = scalar_lea.vmem %s3, %s1245
      $region44: #{conv_block_forward.1} parent=39 // pred_fallthru
        _
    $region40: #{conv_block_forward.1} parent=5 // pred_fallthru
      _
  $region6: #{conv_block_forward.1} parent=0 // loop_footer
    %s13 = sadd.s32 1, %s9
  $region7: #{conv_block_forward.1} parent=0 // loop_footer_branch
    %8 = sbr.rel target = $region3
  $region8: #{conv_block_forward.1} parent=0 // loop_exit
    _

</llo_original>
